<compile_context>
chip_gen: v7x
topology: tpu7x:2x2x1
jax: 0.10.0
libtpu: 0.0.40
codegen_flags: <defaults>
</compile_context>

<pallas_src>
import functools

import jax
import jax.numpy as jnp
from jax import lax
from jax.experimental import pallas as pl
from jax.experimental.pallas import tpu as pltpu


def _shortcut_kernel(sel_ref, x_ref, o_ref, *, pad, precision):
    """sel: (H*W, Ho*Wo) one-hot; x: (bn, C, H*W); o: (bn, C+2*pad, Ho*Wo)."""
    bn, C, HW = x_ref.shape
    _, _, HoWo = o_ref.shape

    sel = sel_ref[...]                                   # resident selector
    x = x_ref[...].astype(sel.dtype).reshape(bn * C, HW)

    # Stride-2 spatial subsample as one lane-dense MXU matmul against the
    # resident one-hot selector (each output = exactly one input * 1.0).
    y = jnp.dot(x, sel, preferred_element_type=jnp.float32, precision=precision)
    y = y.astype(o_ref.dtype).reshape(bn, C, HoWo)

    # Assemble the channel-padded tile once and issue a single full store.
    if pad > 0:
        z = jnp.zeros((bn, pad, HoWo), o_ref.dtype)
        y = jnp.concatenate([z, y, z], axis=1)
    o_ref[...] = y


def _choose_block_n(N, per_img_bytes, target_bytes=2 << 20):
    """Largest divisor of N whose input block stays under ~target_bytes."""
    divisors = [b for b in range(1, N + 1) if N % b == 0]
    fitting = [b for b in divisors if b * per_img_bytes <= target_bytes] or [1]
    block_n = max(fitting)
    grid_n = N // block_n
    # v7x has 2 TensorCores: prefer an even step count when it does not shrink
    # the block below half the bandwidth target.
    if grid_n > 1 and grid_n % 2 == 1:
        even = [b for b in fitting if (N // b) % 2 == 0 and 2 * b >= block_n]
        if even:
            block_n = max(even)
    return block_n


def lambda_layer(x, planes=8, block_n=None):
    """lambda x: F.pad(x[:, :, ::2, ::2], (0,0,0,0,planes//4,planes//4)).

    x: (N, C, H, W) float array.  Returns
    (N, C + 2*(planes//4), ceil(H/2), ceil(W/2)) in the same dtype, NCHW in
    and out (no relayout glue around the kernel).
    """
    pad = planes // 4
    N, C, H, W = x.shape
    Ho, Wo = -(-H // 2), -(-W // 2)          # ceil: matches x[:, :, ::2, ::2]
    C_out = C + 2 * pad
    HW, HoWo = H * W, Ho * Wo

    if block_n is None:
        block_n = _choose_block_n(N, C * HW * x.dtype.itemsize)
    assert N % block_n == 0, (N, block_n)
    grid_n = N // block_n

    # One-hot stride-2 selector over the flattened spatial dim:
    #   sel[i, ho*Wo + wo] = 1  iff  i == (2*ho)*W + 2*wo.
    if x.dtype == jnp.bfloat16:
        sel_dtype, precision = jnp.bfloat16, lax.Precision.DEFAULT
    else:
        sel_dtype, precision = jnp.float32, lax.Precision.HIGHEST
    src = (2 * W * jnp.arange(Ho)[:, None] + 2 * jnp.arange(Wo)[None, :]).reshape(-1)
    sel = (jnp.arange(HW)[:, None] == src[None, :]).astype(sel_dtype)

    x_flat = x.reshape(N, C, HW)             # free: collapses trailing dims

    kernel = functools.partial(_shortcut_kernel, pad=pad, precision=precision)
    out = pl.pallas_call(
        kernel,
        out_shape=jax.ShapeDtypeStruct((N, C_out, HoWo), x.dtype),
        grid=(grid_n,),
        in_specs=[
            pl.BlockSpec((HW, HoWo), lambda n: (0, 0)),          # resident sel
            pl.BlockSpec((block_n, C, HW), lambda n: (n, 0, 0)),
        ],
        out_specs=pl.BlockSpec((block_n, C_out, HoWo), lambda n: (n, 0, 0)),
        compiler_params=pltpu.CompilerParams(
            dimension_semantics=("parallel",)),
    )(sel, x_flat)

    return out.reshape(N, C_out, Ho, Wo)     # free: expands trailing dims


if __name__ == "__main__":
    key = jax.random.PRNGKey(0)
    N, C, H, W = 2, 4, 16, 16
    planes = 8                                # => pad = 2, C_out = 8
    x = jax.random.normal(key, (N, C, H, W), dtype=jnp.float32)

    out = jax.block_until_ready(lambda_layer(x, planes=planes))

    # Pure-JAX reference of the PyTorch lambda.
    pad = planes // 4
    ref = jnp.pad(x[:, :, ::2, ::2],
                  ((0, 0), (pad, pad), (0, 0), (0, 0)),
                  mode="constant", constant_values=0.0)

    assert out.shape == (N, C + 2 * pad, (H + 1) // 2, (W + 1) // 2), out.shape
    assert out.dtype == x.dtype
    assert jnp.allclose(out, ref, atol=1e-6, rtol=0.0), "mismatch vs reference"

    print("KERNEL_OK")
</pallas_src>

<mosaic_0001>
module attributes {stable_mosaic.version = 11 : i64} {
  func.func @_shortcut_kernel(%arg0: i32, %arg1: memref<256x64xf32, #tpu.memory_space<vmem>>, %arg2: memref<2x4x256xf32, #tpu.memory_space<vmem>>, %arg3: memref<2x8x64xf32, #tpu.memory_space<vmem>>) attributes {dimension_semantics = [#tpu.dimension_semantics<parallel>], iteration_bounds = array<i64: 1>, scalar_prefetch = 0 : i64, scratch_operands = 0 : i64, tpu.core_type = #tpu.core_type<tc>, window_params = [{pipeline_mode = #tpu.pipeline_mode<synchronous>, transform_indices = @transform_0, window_bounds = array<i64: 256, 64>}, {transform_indices = @transform_1, window_bounds = array<i64: 2, 4, 256>}, {transform_indices = @transform_2, window_bounds = array<i64: 2, 8, 64>}]} {
    %c0 = arith.constant 0 : index
    %c0_0 = arith.constant 0 : index
    %0 = vector.load %arg1[%c0, %c0_0] : memref<256x64xf32, #tpu.memory_space<vmem>>, vector<256x64xf32>
    %c0_1 = arith.constant 0 : index
    %c0_2 = arith.constant 0 : index
    %c0_3 = arith.constant 0 : index
    %1 = vector.load %arg2[%c0_1, %c0_2, %c0_3] : memref<2x4x256xf32, #tpu.memory_space<vmem>>, vector<2x4x256xf32>
    %2 = vector.shape_cast %1 : vector<2x4x256xf32> to vector<8x256xf32>
    %cst = arith.constant dense<0.000000e+00> : vector<8x64xf32>
    %3 = tpu.matmul %2, %0, %cst {dimension_numbers = #tpu.dot_dimension_numbers<[1], [0], [0], [1], [0, 0, 1, 1], [], []>, precision = #tpu.contract_precision<fp32>} : vector<8x256xf32>, vector<256x64xf32>, vector<8x64xf32> -> vector<8x64xf32>
    %4 = vector.shape_cast %3 : vector<8x64xf32> to vector<2x4x64xf32>
    %cst_4 = arith.constant 0.000000e+00 : f32
    %5 = vector.broadcast %cst_4 : f32 to vector<2x2x64xf32>
    %6 = tpu.concatenate %5, %4, %5 in 1 : vector<2x2x64xf32>, vector<2x4x64xf32>, vector<2x2x64xf32> -> vector<2x8x64xf32>
    %c0_5 = arith.constant 0 : index
    %c0_6 = arith.constant 0 : index
    %c0_7 = arith.constant 0 : index
    %7 = vector.load %arg3[%c0_5, %c0_6, %c0_7] : memref<2x8x64xf32, #tpu.memory_space<vmem>>, vector<2x8x64xf32>
    tpu.vector_store %arg3[%c0_5, %c0_6, %c0_7], %6 {strides = array<i32>} : memref<2x8x64xf32, #tpu.memory_space<vmem>>, vector<2x8x64xf32>,
    return
  }
  func.func @transform_0(%arg0: i32) -> (i32, i32) {
    %c0_i32 = arith.constant 0 : i32
    %c0_i32_0 = arith.constant 0 : i32
    %c0_i32_1 = arith.constant 0 : i32
    return %c0_i32, %c0_i32_0 : i32, i32
  }
  func.func @transform_1(%arg0: i32) -> (i32, i32, i32) {
    %c0_i32 = arith.constant 0 : i32
    %c0_i32_0 = arith.constant 0 : i32
    %c0_i32_1 = arith.constant 0 : i32
    return %arg0, %c0_i32, %c0_i32_0 : i32, i32, i32
  }
  func.func @transform_2(%arg0: i32) -> (i32, i32, i32) {
    %c0_i32 = arith.constant 0 : i32
    %c0_i32_0 = arith.constant 0 : i32
    %c0_i32_1 = arith.constant 0 : i32
    return %arg0, %c0_i32, %c0_i32_0 : i32, i32, i32
  }
}

</mosaic_0001>

<llo_original>
// kernel: tpu_custom_call.1
$region0: #{tpu_custom_call.1}
  #allocation0 [shape = 'u32[]', space=smem, size = 0x4, offset = 0x4, fixed_abs, tag = 'smem constant byte address 0x4 - core index']
  #allocation1 [shape = 'u32[144,128]{1,0:T(1,128)}', space=vmem, size = 0x12000, scoped, tag = 'internal scratch']
  %s0 = inlined_call_operand.vmem [shape: f32[256,64], index: 0, kind: input, shape index: {}]
  %s1 = inlined_call_operand.vmem [shape: f32[2,4,256], index: 1, kind: input, shape index: {}]
  %s2 = inlined_call_operand.hbm [shape: f32[2,8,64], index: 2, kind: output, shape index: {}]
  %s3 = sld [smem:[#allocation0]]
  $region18: #{tpu_custom_call.1} parent=0
    _
  %s5 = ssub.s32 1, %s3
  %s6 = scalar_select 0, %s5, %s3
  $region1: #{tpu_custom_call.1} parent=0
    #allocation2 [shape = 'u8[8192]{0}', space=vmem, size = 0x2000, scoped, tag = 'output window, operand 0, single buffered']
    #allocation3 [shape = 's32[1]{0}', space=sflag, size = 0x4, scoped, tag = 'scoped memory for tpu_custom_call.1']
    %7 = vsyncpa [#allocation3], 0
    // Predicated region
    $region2: #{tpu_custom_call.1} parent=1 // pred_check
      _
    $region3: #{tpu_custom_call.1} parent=1 // pred_check_branch
      %9 = sbr.rel (0) target = $region5
    $region4: #{tpu_custom_call.1} parent=1 // pred_region
      _
    $region5: #{tpu_custom_call.1} parent=1 // pred_fallthru
      _
    // Predicated region
    $region6: #{tpu_custom_call.1} parent=1 // pred_check
      _
    $region7: #{tpu_custom_call.1} parent=1 // pred_check_branch
      %11 = sbr.rel (0) target = $region9
    $region8: #{tpu_custom_call.1} parent=1 // pred_region
      _
    $region9: #{tpu_custom_call.1} parent=1 // pred_fallthru
      _
    %v12 = vld [vmem:[%s0] sm:$0xff]
    %v13 = vld [vmem:[%s0 + $0x8] sm:$0xff]
    %v14 = vld [vmem:[%s0 + $0x10] sm:$0xff]
    %v15 = vld [vmem:[%s0 + $0x18] sm:$0xff]
    %v16 = vld [vmem:[%s0 + $0x20] sm:$0xff]
    %v17 = vld [vmem:[%s0 + $0x28] sm:$0xff]
    %v18 = vld [vmem:[%s0 + $0x30] sm:$0xff]
    %v19 = vld [vmem:[%s0 + $0x38] sm:$0xff]
    %v20 = vld [vmem:[%s0 + $0x40] sm:$0xff]
    %v21 = vld [vmem:[%s0 + $0x48] sm:$0xff]
    %v22 = vld [vmem:[%s0 + $0x50] sm:$0xff]
    %v23 = vld [vmem:[%s0 + $0x58] sm:$0xff]
    %v24 = vld [vmem:[%s0 + $0x60] sm:$0xff]
    %v25 = vld [vmem:[%s0 + $0x68] sm:$0xff]
    %v26 = vld [vmem:[%s0 + $0x70] sm:$0xff]
    %v27 = vld [vmem:[%s0 + $0x78] sm:$0xff]
    %v28 = vld [vmem:[%s0 + $0x80] sm:$0xff]
    %v29 = vld [vmem:[%s0 + $0x88] sm:$0xff]
    %v30 = vld [vmem:[%s0 + $0x90] sm:$0xff]
    %v31 = vld [vmem:[%s0 + $0x98] sm:$0xff]
    %v32 = vld [vmem:[%s0 + $0xa0] sm:$0xff]
    %v33 = vld [vmem:[%s0 + $0xa8] sm:$0xff]
    %v34 = vld [vmem:[%s0 + $0xb0] sm:$0xff]
    %v35 = vld [vmem:[%s0 + $0xb8] sm:$0xff]
    %v36 = vld [vmem:[%s0 + $0xc0] sm:$0xff]
    %v37 = vld [vmem:[%s0 + $0xc8] sm:$0xff]
    %v38 = vld [vmem:[%s0 + $0xd0] sm:$0xff]
    %v39 = vld [vmem:[%s0 + $0xd8] sm:$0xff]
    %v40 = vld [vmem:[%s0 + $0xe0] sm:$0xff]
    %v41 = vld [vmem:[%s0 + $0xe8] sm:$0xff]
    %v42 = vld [vmem:[%s0 + $0xf0] sm:$0xff]
    %v43 = vld [vmem:[%s0 + $0xf8] sm:$0xff]
    %v44 = vld [vmem:[%s1] sm:$0xff]
    %v45 = vld [vmem:[%s1 + $0x8] sm:$0xff]
    %v48 = vcombine.low %v44, %v45
    %v49 = vcombine.high %v44, %v45
    %52 = vmatprep.subr.mxu0 0.0
    %v53 = vand.u32 %v12, 4294901760
    %54 = vmatpush1.msra.mxu0 %v53
    %55 = vmatprep.subr.mxu0 0.0
    %v56 = vand.u32 %v13, 4294901760
    %57 = vmatpush1.msra.mxu0 %v56
    %58 = vmatprep.subr.mxu0 0.0
    %v59 = vand.u32 %v14, 4294901760
    %60 = vmatpush1.msra.mxu0 %v59
    %61 = vmatprep.subr.mxu0 0.0
    %v62 = vand.u32 %v15, 4294901760
    %63 = vmatpush1.msra.mxu0 %v62
    %64 = vmatprep.subr.mxu0 0.0
    %v65 = vand.u32 %v16, 4294901760
    %66 = vmatpush1.msra.mxu0 %v65
    %67 = vmatprep.subr.mxu0 0.0
    %v68 = vand.u32 %v17, 4294901760
    %69 = vmatpush1.msra.mxu0 %v68
    %70 = vmatprep.subr.mxu0 0.0
    %v71 = vand.u32 %v18, 4294901760
    %72 = vmatpush1.msra.mxu0 %v71
    %73 = vmatprep.subr.mxu0 0.0
    %v74 = vand.u32 %v19, 4294901760
    %75 = vmatpush1.msra.mxu0 %v74
    %76 = vmatprep.subr.mxu0 0.0
    %v77 = vand.u32 %v20, 4294901760
    %78 = vmatpush1.msra.mxu0 %v77
    %79 = vmatprep.subr.mxu0 0.0
    %v80 = vand.u32 %v21, 4294901760
    %81 = vmatpush1.msra.mxu0 %v80
    %82 = vmatprep.subr.mxu0 0.0
    %v83 = vand.u32 %v22, 4294901760
    %84 = vmatpush1.msra.mxu0 %v83
    %85 = vmatprep.subr.mxu0 0.0
    %v86 = vand.u32 %v23, 4294901760
    %87 = vmatpush1.msra.mxu0 %v86
    %88 = vmatprep.subr.mxu0 0.0
    %v89 = vand.u32 %v24, 4294901760
    %90 = vmatpush1.msra.mxu0 %v89
    %91 = vmatprep.subr.mxu0 0.0
    %v92 = vand.u32 %v25, 4294901760
    %93 = vmatpush1.msra.mxu0 %v92
    %94 = vmatprep.subr.mxu0 0.0
    %v95 = vand.u32 %v26, 4294901760
    %96 = vmatpush1.msra.mxu0 %v95
    %97 = vmatprep.subr.mxu0 0.0
    %v98 = vand.u32 %v27, 4294901760
    %99 = vmatpush1.msra.mxu0 %v98
    %100 = vmatprep.subr.mxu0 0.0
    %v101 = vand.u32 %v28, 4294901760
    %102 = vmatpush1.msra.mxu0 %v101
    %103 = vmatprep.subr.mxu0 0.0
    %v104 = vand.u32 %v29, 4294901760
    %105 = vmatpush1.msra.mxu0 %v104
    %106 = vmatprep.subr.mxu0 0.0
    %v107 = vand.u32 %v30, 4294901760
    %108 = vmatpush1.msra.mxu0 %v107
    %109 = vmatprep.subr.mxu0 0.0
    %v110 = vand.u32 %v31, 4294901760
    %111 = vmatpush1.msra.mxu0 %v110
    %112 = vmatprep.subr.mxu0 0.0
    %v113 = vand.u32 %v32, 4294901760
    %114 = vmatpush1.msra.mxu0 %v113
    %115 = vmatprep.subr.mxu0 0.0
    %v116 = vand.u32 %v33, 4294901760
    %117 = vmatpush1.msra.mxu0 %v116
    %118 = vmatprep.subr.mxu0 0.0
    %v119 = vand.u32 %v34, 4294901760
    %120 = vmatpush1.msra.mxu0 %v119
    %121 = vmatprep.subr.mxu0 0.0
    %v122 = vand.u32 %v35, 4294901760
    %123 = vmatpush1.msra.mxu0 %v122
    %124 = vmatprep.subr.mxu0 0.0
    %v125 = vand.u32 %v36, 4294901760
    %126 = vmatpush1.msra.mxu0 %v125
    %127 = vmatprep.subr.mxu0 0.0
    %v128 = vand.u32 %v37, 4294901760
    %129 = vmatpush1.msra.mxu0 %v128
    %130 = vmatprep.subr.mxu0 0.0
    %v131 = vand.u32 %v38, 4294901760
    %132 = vmatpush1.msra.mxu0 %v131
    %133 = vmatprep.subr.mxu0 0.0
    %v134 = vand.u32 %v39, 4294901760
    %135 = vmatpush1.msra.mxu0 %v134
    %136 = vmatprep.subr.mxu0 0.0
    %v137 = vand.u32 %v40, 4294901760
    %138 = vmatpush1.msra.mxu0 %v137
    %139 = vmatprep.subr.mxu0 0.0
    %v140 = vand.u32 %v41, 4294901760
    %141 = vmatpush1.msra.mxu0 %v140
    %142 = vmatprep.subr.mxu0 0.0
    %v143 = vand.u32 %v42, 4294901760
    %144 = vmatpush1.msra.mxu0 %v143
    %145 = vmatprep.subr.mxu0 0.0
    %v146 = vand.u32 %v43, 4294901760
    %147 = vmatpush1.msra.mxu0 %v146
    %v148 = vand.u32 %v49, 4294901760
    %v149 = vsub.f32 %v49, %v148
    %v150 = vand.u32 %v149, 4294901760
    %v151 = vsub.f32 %v149, %v150
    %v152 = vand.u32 %v151, 4294901760
    %153 = vmatprep.mubr.f32.mxu0 %v152
    %v154 = vand.u32 %v48, 4294901760
    %v155 = vsub.f32 %v48, %v154
    %v156 = vand.u32 %v155, 4294901760
    %v157 = vsub.f32 %v155, %v156
    %v158 = vand.u32 %v157, 4294901760
    %159 = vmatmul.mubr.f32.gmra.mrb[0].mxu0 %v158
    %v160 = vpop.f32.mrb[0].mxu0
    %v161 = vadd.f32 0.0, %v160
    %v162 = vpop.f32.mrb[0].mxu0
    %163 = vdwg.mxu0
    %164 = vmatprep.subr.mxu0 0.0
    %v165 = vand.u32 %v12, 4294901760
    %v166 = vsub.f32 %v12, %v165
    %v167 = vand.u32 %v166, 4294901760
    %v168 = vsub.f32 %v166, %v167
    %v169 = vand.u32 %v168, 4294901760
    %170 = vmatpush1.msra.mxu0 %v169
    %171 = vmatprep.subr.mxu0 0.0
    %v172 = vand.u32 %v13, 4294901760
    %v173 = vsub.f32 %v13, %v172
    %v174 = vand.u32 %v173, 4294901760
    %v175 = vsub.f32 %v173, %v174
    %v176 = vand.u32 %v175, 4294901760
    %177 = vmatpush1.msra.mxu0 %v176
    %178 = vmatprep.subr.mxu0 0.0
    %v179 = vand.u32 %v14, 4294901760
    %v180 = vsub.f32 %v14, %v179
    %v181 = vand.u32 %v180, 4294901760
    %v182 = vsub.f32 %v180, %v181
    %v183 = vand.u32 %v182, 4294901760
    %184 = vmatpush1.msra.mxu0 %v183
    %185 = vmatprep.subr.mxu0 0.0
    %v186 = vand.u32 %v15, 4294901760
    %v187 = vsub.f32 %v15, %v186
    %v188 = vand.u32 %v187, 4294901760
    %v189 = vsub.f32 %v187, %v188
    %v190 = vand.u32 %v189, 4294901760
    %191 = vmatpush1.msra.mxu0 %v190
    %192 = vmatprep.subr.mxu0 0.0
    %v193 = vand.u32 %v16, 4294901760
    %v194 = vsub.f32 %v16, %v193
    %v195 = vand.u32 %v194, 4294901760
    %v196 = vsub.f32 %v194, %v195
    %v197 = vand.u32 %v196, 4294901760
    %198 = vmatpush1.msra.mxu0 %v197
    %199 = vmatprep.subr.mxu0 0.0
    %v200 = vand.u32 %v17, 4294901760
    %v201 = vsub.f32 %v17, %v200
    %v202 = vand.u32 %v201, 4294901760
    %v203 = vsub.f32 %v201, %v202
    %v204 = vand.u32 %v203, 4294901760
    %205 = vmatpush1.msra.mxu0 %v204
    %206 = vmatprep.subr.mxu0 0.0
    %v207 = vand.u32 %v18, 4294901760
    %v208 = vsub.f32 %v18, %v207
    %v209 = vand.u32 %v208, 4294901760
    %v210 = vsub.f32 %v208, %v209
    %v211 = vand.u32 %v210, 4294901760
    %212 = vmatpush1.msra.mxu0 %v211
    %213 = vmatprep.subr.mxu0 0.0
    %v214 = vand.u32 %v19, 4294901760
    %v215 = vsub.f32 %v19, %v214
    %v216 = vand.u32 %v215, 4294901760
    %v217 = vsub.f32 %v215, %v216
    %v218 = vand.u32 %v217, 4294901760
    %219 = vmatpush1.msra.mxu0 %v218
    %220 = vmatprep.subr.mxu0 0.0
    %v221 = vand.u32 %v20, 4294901760
    %v222 = vsub.f32 %v20, %v221
    %v223 = vand.u32 %v222, 4294901760
    %v224 = vsub.f32 %v222, %v223
    %v225 = vand.u32 %v224, 4294901760
    %226 = vmatpush1.msra.mxu0 %v225
    %227 = vmatprep.subr.mxu0 0.0
    %v228 = vand.u32 %v21, 4294901760
    %v229 = vsub.f32 %v21, %v228
    %v230 = vand.u32 %v229, 4294901760
    %v231 = vsub.f32 %v229, %v230
    %v232 = vand.u32 %v231, 4294901760
    %233 = vmatpush1.msra.mxu0 %v232
    %234 = vmatprep.subr.mxu0 0.0
    %v235 = vand.u32 %v22, 4294901760
    %v236 = vsub.f32 %v22, %v235
    %v237 = vand.u32 %v236, 4294901760
    %v238 = vsub.f32 %v236, %v237
    %v239 = vand.u32 %v238, 4294901760
    %240 = vmatpush1.msra.mxu0 %v239
    %241 = vmatprep.subr.mxu0 0.0
    %v242 = vand.u32 %v23, 4294901760
    %v243 = vsub.f32 %v23, %v242
    %v244 = vand.u32 %v243, 4294901760
    %v245 = vsub.f32 %v243, %v244
    %v246 = vand.u32 %v245, 4294901760
    %247 = vmatpush1.msra.mxu0 %v246
    %248 = vmatprep.subr.mxu0 0.0
    %v249 = vand.u32 %v24, 4294901760
    %v250 = vsub.f32 %v24, %v249
    %v251 = vand.u32 %v250, 4294901760
    %v252 = vsub.f32 %v250, %v251
    %v253 = vand.u32 %v252, 4294901760
    %254 = vmatpush1.msra.mxu0 %v253
    %255 = vmatprep.subr.mxu0 0.0
    %v256 = vand.u32 %v25, 4294901760
    %v257 = vsub.f32 %v25, %v256
    %v258 = vand.u32 %v257, 4294901760
    %v259 = vsub.f32 %v257, %v258
    %v260 = vand.u32 %v259, 4294901760
    %261 = vmatpush1.msra.mxu0 %v260
    %262 = vmatprep.subr.mxu0 0.0
    %v263 = vand.u32 %v26, 4294901760
    %v264 = vsub.f32 %v26, %v263
    %v265 = vand.u32 %v264, 4294901760
    %v266 = vsub.f32 %v264, %v265
    %v267 = vand.u32 %v266, 4294901760
    %268 = vmatpush1.msra.mxu0 %v267
    %269 = vmatprep.subr.mxu0 0.0
    %v270 = vand.u32 %v27, 4294901760
    %v271 = vsub.f32 %v27, %v270
    %v272 = vand.u32 %v271, 4294901760
    %v273 = vsub.f32 %v271, %v272
    %v274 = vand.u32 %v273, 4294901760
    %275 = vmatpush1.msra.mxu0 %v274
    %276 = vmatprep.subr.mxu0 0.0
    %v277 = vand.u32 %v28, 4294901760
    %v278 = vsub.f32 %v28, %v277
    %v279 = vand.u32 %v278, 4294901760
    %v280 = vsub.f32 %v278, %v279
    %v281 = vand.u32 %v280, 4294901760
    %282 = vmatpush1.msra.mxu0 %v281
    %283 = vmatprep.subr.mxu0 0.0
    %v284 = vand.u32 %v29, 4294901760
    %v285 = vsub.f32 %v29, %v284
    %v286 = vand.u32 %v285, 4294901760
    %v287 = vsub.f32 %v285, %v286
    %v288 = vand.u32 %v287, 4294901760
    %289 = vmatpush1.msra.mxu0 %v288
    %290 = vmatprep.subr.mxu0 0.0
    %v291 = vand.u32 %v30, 4294901760
    %v292 = vsub.f32 %v30, %v291
    %v293 = vand.u32 %v292, 4294901760
    %v294 = vsub.f32 %v292, %v293
    %v295 = vand.u32 %v294, 4294901760
    %296 = vmatpush1.msra.mxu0 %v295
    %297 = vmatprep.subr.mxu0 0.0
    %v298 = vand.u32 %v31, 4294901760
    %v299 = vsub.f32 %v31, %v298
    %v300 = vand.u32 %v299, 4294901760
    %v301 = vsub.f32 %v299, %v300
    %v302 = vand.u32 %v301, 4294901760
    %303 = vmatpush1.msra.mxu0 %v302
    %304 = vmatprep.subr.mxu0 0.0
    %v305 = vand.u32 %v32, 4294901760
    %v306 = vsub.f32 %v32, %v305
    %v307 = vand.u32 %v306, 4294901760
    %v308 = vsub.f32 %v306, %v307
    %v309 = vand.u32 %v308, 4294901760
    %310 = vmatpush1.msra.mxu0 %v309
    %311 = vmatprep.subr.mxu0 0.0
    %v312 = vand.u32 %v33, 4294901760
    %v313 = vsub.f32 %v33, %v312
    %v314 = vand.u32 %v313, 4294901760
    %v315 = vsub.f32 %v313, %v314
    %v316 = vand.u32 %v315, 4294901760
    %317 = vmatpush1.msra.mxu0 %v316
    %318 = vmatprep.subr.mxu0 0.0
    %v319 = vand.u32 %v34, 4294901760
    %v320 = vsub.f32 %v34, %v319
    %v321 = vand.u32 %v320, 4294901760
    %v322 = vsub.f32 %v320, %v321
    %v323 = vand.u32 %v322, 4294901760
    %324 = vmatpush1.msra.mxu0 %v323
    %325 = vmatprep.subr.mxu0 0.0
    %v326 = vand.u32 %v35, 4294901760
    %v327 = vsub.f32 %v35, %v326
    %v328 = vand.u32 %v327, 4294901760
    %v329 = vsub.f32 %v327, %v328
    %v330 = vand.u32 %v329, 4294901760
    %331 = vmatpush1.msra.mxu0 %v330
    %332 = vmatprep.subr.mxu0 0.0
    %v333 = vand.u32 %v36, 4294901760
    %v334 = vsub.f32 %v36, %v333
    %v335 = vand.u32 %v334, 4294901760
    %v336 = vsub.f32 %v334, %v335
    %v337 = vand.u32 %v336, 4294901760
    %338 = vmatpush1.msra.mxu0 %v337
    %339 = vmatprep.subr.mxu0 0.0
    %v340 = vand.u32 %v37, 4294901760
    %v341 = vsub.f32 %v37, %v340
    %v342 = vand.u32 %v341, 4294901760
    %v343 = vsub.f32 %v341, %v342
    %v344 = vand.u32 %v343, 4294901760
    %345 = vmatpush1.msra.mxu0 %v344
    %346 = vmatprep.subr.mxu0 0.0
    %v347 = vand.u32 %v38, 4294901760
    %v348 = vsub.f32 %v38, %v347
    %v349 = vand.u32 %v348, 4294901760
    %v350 = vsub.f32 %v348, %v349
    %v351 = vand.u32 %v350, 4294901760
    %352 = vmatpush1.msra.mxu0 %v351
    %353 = vmatprep.subr.mxu0 0.0
    %v354 = vand.u32 %v39, 4294901760
    %v355 = vsub.f32 %v39, %v354
    %v356 = vand.u32 %v355, 4294901760
    %v357 = vsub.f32 %v355, %v356
    %v358 = vand.u32 %v357, 4294901760
    %359 = vmatpush1.msra.mxu0 %v358
    %360 = vmatprep.subr.mxu0 0.0
    %v361 = vand.u32 %v40, 4294901760
    %v362 = vsub.f32 %v40, %v361
    %v363 = vand.u32 %v362, 4294901760
    %v364 = vsub.f32 %v362, %v363
    %v365 = vand.u32 %v364, 4294901760
    %366 = vmatpush1.msra.mxu0 %v365
    %367 = vmatprep.subr.mxu0 0.0
    %v368 = vand.u32 %v41, 4294901760
    %v369 = vsub.f32 %v41, %v368
    %v370 = vand.u32 %v369, 4294901760
    %v371 = vsub.f32 %v369, %v370
    %v372 = vand.u32 %v371, 4294901760
    %373 = vmatpush1.msra.mxu0 %v372
    %374 = vmatprep.subr.mxu0 0.0
    %v375 = vand.u32 %v42, 4294901760
    %v376 = vsub.f32 %v42, %v375
    %v377 = vand.u32 %v376, 4294901760
    %v378 = vsub.f32 %v376, %v377
    %v379 = vand.u32 %v378, 4294901760
    %380 = vmatpush1.msra.mxu0 %v379
    %381 = vmatprep.subr.mxu0 0.0
    %v382 = vand.u32 %v43, 4294901760
    %v383 = vsub.f32 %v43, %v382
    %v384 = vand.u32 %v383, 4294901760
    %v385 = vsub.f32 %v383, %v384
    %v386 = vand.u32 %v385, 4294901760
    %387 = vmatpush1.msra.mxu0 %v386
    %v388 = vand.u32 %v49, 4294901760
    %389 = vmatprep.mubr.f32.mxu0 %v388
    %v390 = vand.u32 %v48, 4294901760
    %391 = vmatmul.mubr.f32.gmra.mrb[0].mxu0 %v390
    %v392 = vpop.f32.mrb[0].mxu0
    %v393 = vadd.f32 %v161, %v392
    %v394 = vpop.f32.mrb[0].mxu0
    %395 = vdwg.mxu0
    %396 = vmatprep.subr.mxu0 0.0
    %v397 = vand.u32 %v12, 4294901760
    %v398 = vsub.f32 %v12, %v397
    %399 = vmatpush1.msra.mxu0 %v398
    %400 = vmatprep.subr.mxu0 0.0
    %v401 = vand.u32 %v13, 4294901760
    %v402 = vsub.f32 %v13, %v401
    %403 = vmatpush1.msra.mxu0 %v402
    %404 = vmatprep.subr.mxu0 0.0
    %v405 = vand.u32 %v14, 4294901760
    %v406 = vsub.f32 %v14, %v405
    %407 = vmatpush1.msra.mxu0 %v406
    %408 = vmatprep.subr.mxu0 0.0
    %v409 = vand.u32 %v15, 4294901760
    %v410 = vsub.f32 %v15, %v409
    %411 = vmatpush1.msra.mxu0 %v410
    %412 = vmatprep.subr.mxu0 0.0
    %v413 = vand.u32 %v16, 4294901760
    %v414 = vsub.f32 %v16, %v413
    %415 = vmatpush1.msra.mxu0 %v414
    %416 = vmatprep.subr.mxu0 0.0
    %v417 = vand.u32 %v17, 4294901760
    %v418 = vsub.f32 %v17, %v417
    %419 = vmatpush1.msra.mxu0 %v418
    %420 = vmatprep.subr.mxu0 0.0
    %v421 = vand.u32 %v18, 4294901760
    %v422 = vsub.f32 %v18, %v421
    %423 = vmatpush1.msra.mxu0 %v422
    %424 = vmatprep.subr.mxu0 0.0
    %v425 = vand.u32 %v19, 4294901760
    %v426 = vsub.f32 %v19, %v425
    %427 = vmatpush1.msra.mxu0 %v426
    %428 = vmatprep.subr.mxu0 0.0
    %v429 = vand.u32 %v20, 4294901760
    %v430 = vsub.f32 %v20, %v429
    %431 = vmatpush1.msra.mxu0 %v430
    %432 = vmatprep.subr.mxu0 0.0
    %v433 = vand.u32 %v21, 4294901760
    %v434 = vsub.f32 %v21, %v433
    %435 = vmatpush1.msra.mxu0 %v434
    %436 = vmatprep.subr.mxu0 0.0
    %v437 = vand.u32 %v22, 4294901760
    %v438 = vsub.f32 %v22, %v437
    %439 = vmatpush1.msra.mxu0 %v438
    %440 = vmatprep.subr.mxu0 0.0
    %v441 = vand.u32 %v23, 4294901760
    %v442 = vsub.f32 %v23, %v441
    %443 = vmatpush1.msra.mxu0 %v442
    %444 = vmatprep.subr.mxu0 0.0
    %v445 = vand.u32 %v24, 4294901760
    %v446 = vsub.f32 %v24, %v445
    %447 = vmatpush1.msra.mxu0 %v446
    %448 = vmatprep.subr.mxu0 0.0
    %v449 = vand.u32 %v25, 4294901760
    %v450 = vsub.f32 %v25, %v449
    %451 = vmatpush1.msra.mxu0 %v450
    %452 = vmatprep.subr.mxu0 0.0
    %v453 = vand.u32 %v26, 4294901760
    %v454 = vsub.f32 %v26, %v453
    %455 = vmatpush1.msra.mxu0 %v454
    %456 = vmatprep.subr.mxu0 0.0
    %v457 = vand.u32 %v27, 4294901760
    %v458 = vsub.f32 %v27, %v457
    %459 = vmatpush1.msra.mxu0 %v458
    %460 = vmatprep.subr.mxu0 0.0
    %v461 = vand.u32 %v28, 4294901760
    %v462 = vsub.f32 %v28, %v461
    %463 = vmatpush1.msra.mxu0 %v462
    %464 = vmatprep.subr.mxu0 0.0
    %v465 = vand.u32 %v29, 4294901760
    %v466 = vsub.f32 %v29, %v465
    %467 = vmatpush1.msra.mxu0 %v466
    %468 = vmatprep.subr.mxu0 0.0
    %v469 = vand.u32 %v30, 4294901760
    %v470 = vsub.f32 %v30, %v469
    %471 = vmatpush1.msra.mxu0 %v470
    %472 = vmatprep.subr.mxu0 0.0
    %v473 = vand.u32 %v31, 4294901760
    %v474 = vsub.f32 %v31, %v473
    %475 = vmatpush1.msra.mxu0 %v474
    %476 = vmatprep.subr.mxu0 0.0
    %v477 = vand.u32 %v32, 4294901760
    %v478 = vsub.f32 %v32, %v477
    %479 = vmatpush1.msra.mxu0 %v478
    %480 = vmatprep.subr.mxu0 0.0
    %v481 = vand.u32 %v33, 4294901760
    %v482 = vsub.f32 %v33, %v481
    %483 = vmatpush1.msra.mxu0 %v482
    %484 = vmatprep.subr.mxu0 0.0
    %v485 = vand.u32 %v34, 4294901760
    %v486 = vsub.f32 %v34, %v485
    %487 = vmatpush1.msra.mxu0 %v486
    %488 = vmatprep.subr.mxu0 0.0
    %v489 = vand.u32 %v35, 4294901760
    %v490 = vsub.f32 %v35, %v489
    %491 = vmatpush1.msra.mxu0 %v490
    %492 = vmatprep.subr.mxu0 0.0
    %v493 = vand.u32 %v36, 4294901760
    %v494 = vsub.f32 %v36, %v493
    %495 = vmatpush1.msra.mxu0 %v494
    %496 = vmatprep.subr.mxu0 0.0
    %v497 = vand.u32 %v37, 4294901760
    %v498 = vsub.f32 %v37, %v497
    %499 = vmatpush1.msra.mxu0 %v498
    %500 = vmatprep.subr.mxu0 0.0
    %v501 = vand.u32 %v38, 4294901760
    %v502 = vsub.f32 %v38, %v501
    %503 = vmatpush1.msra.mxu0 %v502
    %504 = vmatprep.subr.mxu0 0.0
    %v505 = vand.u32 %v39, 4294901760
    %v506 = vsub.f32 %v39, %v505
    %507 = vmatpush1.msra.mxu0 %v506
    %508 = vmatprep.subr.mxu0 0.0
    %v509 = vand.u32 %v40, 4294901760
    %v510 = vsub.f32 %v40, %v509
    %511 = vmatpush1.msra.mxu0 %v510
    %512 = vmatprep.subr.mxu0 0.0
    %v513 = vand.u32 %v41, 4294901760
    %v514 = vsub.f32 %v41, %v513
    %515 = vmatpush1.msra.mxu0 %v514
    %516 = vmatprep.subr.mxu0 0.0
    %v517 = vand.u32 %v42, 4294901760
    %v518 = vsub.f32 %v42, %v517
    %519 = vmatpush1.msra.mxu0 %v518
    %520 = vmatprep.subr.mxu0 0.0
    %v521 = vand.u32 %v43, 4294901760
    %v522 = vsub.f32 %v43, %v521
    %523 = vmatpush1.msra.mxu0 %v522
    %v524 = vand.u32 %v49, 4294901760
    %v525 = vsub.f32 %v49, %v524
    %526 = vmatprep.mubr.f32.mxu0 %v525
    %v527 = vand.u32 %v48, 4294901760
    %v528 = vsub.f32 %v48, %v527
    %529 = vmatmul.mubr.f32.gmra.mrb[0].mxu0 %v528
    %v530 = vpop.f32.mrb[0].mxu0
    %v531 = vadd.f32 %v393, %v530
    %v532 = vpop.f32.mrb[0].mxu0
    %533 = vdwg.mxu0
    %534 = vmatprep.subr.mxu0 0.0
    %v535 = vand.u32 %v12, 4294901760
    %536 = vmatpush1.msra.mxu0 %v535
    %537 = vmatprep.subr.mxu0 0.0
    %v538 = vand.u32 %v13, 4294901760
    %539 = vmatpush1.msra.mxu0 %v538
    %540 = vmatprep.subr.mxu0 0.0
    %v541 = vand.u32 %v14, 4294901760
    %542 = vmatpush1.msra.mxu0 %v541
    %543 = vmatprep.subr.mxu0 0.0
    %v544 = vand.u32 %v15, 4294901760
    %545 = vmatpush1.msra.mxu0 %v544
    %546 = vmatprep.subr.mxu0 0.0
    %v547 = vand.u32 %v16, 4294901760
    %548 = vmatpush1.msra.mxu0 %v547
    %549 = vmatprep.subr.mxu0 0.0
    %v550 = vand.u32 %v17, 4294901760
    %551 = vmatpush1.msra.mxu0 %v550
    %552 = vmatprep.subr.mxu0 0.0
    %v553 = vand.u32 %v18, 4294901760
    %554 = vmatpush1.msra.mxu0 %v553
    %555 = vmatprep.subr.mxu0 0.0
    %v556 = vand.u32 %v19, 4294901760
    %557 = vmatpush1.msra.mxu0 %v556
    %558 = vmatprep.subr.mxu0 0.0
    %v559 = vand.u32 %v20, 4294901760
    %560 = vmatpush1.msra.mxu0 %v559
    %561 = vmatprep.subr.mxu0 0.0
    %v562 = vand.u32 %v21, 4294901760
    %563 = vmatpush1.msra.mxu0 %v562
    %564 = vmatprep.subr.mxu0 0.0
    %v565 = vand.u32 %v22, 4294901760
    %566 = vmatpush1.msra.mxu0 %v565
    %567 = vmatprep.subr.mxu0 0.0
    %v568 = vand.u32 %v23, 4294901760
    %569 = vmatpush1.msra.mxu0 %v568
    %570 = vmatprep.subr.mxu0 0.0
    %v571 = vand.u32 %v24, 4294901760
    %572 = vmatpush1.msra.mxu0 %v571
    %573 = vmatprep.subr.mxu0 0.0
    %v574 = vand.u32 %v25, 4294901760
    %575 = vmatpush1.msra.mxu0 %v574
    %576 = vmatprep.subr.mxu0 0.0
    %v577 = vand.u32 %v26, 4294901760
    %578 = vmatpush1.msra.mxu0 %v577
    %579 = vmatprep.subr.mxu0 0.0
    %v580 = vand.u32 %v27, 4294901760
    %581 = vmatpush1.msra.mxu0 %v580
    %582 = vmatprep.subr.mxu0 0.0
    %v583 = vand.u32 %v28, 4294901760
    %584 = vmatpush1.msra.mxu0 %v583
    %585 = vmatprep.subr.mxu0 0.0
    %v586 = vand.u32 %v29, 4294901760
    %587 = vmatpush1.msra.mxu0 %v586
    %588 = vmatprep.subr.mxu0 0.0
    %v589 = vand.u32 %v30, 4294901760
    %590 = vmatpush1.msra.mxu0 %v589
    %591 = vmatprep.subr.mxu0 0.0
    %v592 = vand.u32 %v31, 4294901760
    %593 = vmatpush1.msra.mxu0 %v592
    %594 = vmatprep.subr.mxu0 0.0
    %v595 = vand.u32 %v32, 4294901760
    %596 = vmatpush1.msra.mxu0 %v595
    %597 = vmatprep.subr.mxu0 0.0
    %v598 = vand.u32 %v33, 4294901760
    %599 = vmatpush1.msra.mxu0 %v598
    %600 = vmatprep.subr.mxu0 0.0
    %v601 = vand.u32 %v34, 4294901760
    %602 = vmatpush1.msra.mxu0 %v601
    %603 = vmatprep.subr.mxu0 0.0
    %v604 = vand.u32 %v35, 4294901760
    %605 = vmatpush1.msra.mxu0 %v604
    %606 = vmatprep.subr.mxu0 0.0
    %v607 = vand.u32 %v36, 4294901760
    %608 = vmatpush1.msra.mxu0 %v607
    %609 = vmatprep.subr.mxu0 0.0
    %v610 = vand.u32 %v37, 4294901760
    %611 = vmatpush1.msra.mxu0 %v610
    %612 = vmatprep.subr.mxu0 0.0
    %v613 = vand.u32 %v38, 4294901760
    %614 = vmatpush1.msra.mxu0 %v613
    %615 = vmatprep.subr.mxu0 0.0
    %v616 = vand.u32 %v39, 4294901760
    %617 = vmatpush1.msra.mxu0 %v616
    %618 = vmatprep.subr.mxu0 0.0
    %v619 = vand.u32 %v40, 4294901760
    %620 = vmatpush1.msra.mxu0 %v619
    %621 = vmatprep.subr.mxu0 0.0
    %v622 = vand.u32 %v41, 4294901760
    %623 = vmatpush1.msra.mxu0 %v622
    %624 = vmatprep.subr.mxu0 0.0
    %v625 = vand.u32 %v42, 4294901760
    %626 = vmatpush1.msra.mxu0 %v625
    %627 = vmatprep.subr.mxu0 0.0
    %v628 = vand.u32 %v43, 4294901760
    %629 = vmatpush1.msra.mxu0 %v628
    %v630 = vand.u32 %v49, 4294901760
    %v631 = vsub.f32 %v49, %v630
    %v632 = vand.u32 %v631, 4294901760
    %633 = vmatprep.mubr.f32.mxu0 %v632
    %v634 = vand.u32 %v48, 4294901760
    %v635 = vsub.f32 %v48, %v634
    %v636 = vand.u32 %v635, 4294901760
    %637 = vmatmul.mubr.f32.gmra.mrb[0].mxu0 %v636
    %v638 = vpop.f32.mrb[0].mxu0
    %v639 = vadd.f32 %v531, %v638
    %v640 = vpop.f32.mrb[0].mxu0
    %641 = vdwg.mxu0
    %642 = vmatprep.subr.mxu0 0.0
    %v643 = vand.u32 %v12, 4294901760
    %v644 = vsub.f32 %v12, %v643
    %v645 = vand.u32 %v644, 4294901760
    %646 = vmatpush1.msra.mxu0 %v645
    %647 = vmatprep.subr.mxu0 0.0
    %v648 = vand.u32 %v13, 4294901760
    %v649 = vsub.f32 %v13, %v648
    %v650 = vand.u32 %v649, 4294901760
    %651 = vmatpush1.msra.mxu0 %v650
    %652 = vmatprep.subr.mxu0 0.0
    %v653 = vand.u32 %v14, 4294901760
    %v654 = vsub.f32 %v14, %v653
    %v655 = vand.u32 %v654, 4294901760
    %656 = vmatpush1.msra.mxu0 %v655
    %657 = vmatprep.subr.mxu0 0.0
    %v658 = vand.u32 %v15, 4294901760
    %v659 = vsub.f32 %v15, %v658
    %v660 = vand.u32 %v659, 4294901760
    %661 = vmatpush1.msra.mxu0 %v660
    %662 = vmatprep.subr.mxu0 0.0
    %v663 = vand.u32 %v16, 4294901760
    %v664 = vsub.f32 %v16, %v663
    %v665 = vand.u32 %v664, 4294901760
    %666 = vmatpush1.msra.mxu0 %v665
    %667 = vmatprep.subr.mxu0 0.0
    %v668 = vand.u32 %v17, 4294901760
    %v669 = vsub.f32 %v17, %v668
    %v670 = vand.u32 %v669, 4294901760
    %671 = vmatpush1.msra.mxu0 %v670
    %672 = vmatprep.subr.mxu0 0.0
    %v673 = vand.u32 %v18, 4294901760
    %v674 = vsub.f32 %v18, %v673
    %v675 = vand.u32 %v674, 4294901760
    %676 = vmatpush1.msra.mxu0 %v675
    %677 = vmatprep.subr.mxu0 0.0
    %v678 = vand.u32 %v19, 4294901760
    %v679 = vsub.f32 %v19, %v678
    %v680 = vand.u32 %v679, 4294901760
    %681 = vmatpush1.msra.mxu0 %v680
    %682 = vmatprep.subr.mxu0 0.0
    %v683 = vand.u32 %v20, 4294901760
    %v684 = vsub.f32 %v20, %v683
    %v685 = vand.u32 %v684, 4294901760
    %686 = vmatpush1.msra.mxu0 %v685
    %687 = vmatprep.subr.mxu0 0.0
    %v688 = vand.u32 %v21, 4294901760
    %v689 = vsub.f32 %v21, %v688
    %v690 = vand.u32 %v689, 4294901760
    %691 = vmatpush1.msra.mxu0 %v690
    %692 = vmatprep.subr.mxu0 0.0
    %v693 = vand.u32 %v22, 4294901760
    %v694 = vsub.f32 %v22, %v693
    %v695 = vand.u32 %v694, 4294901760
    %696 = vmatpush1.msra.mxu0 %v695
    %697 = vmatprep.subr.mxu0 0.0
    %v698 = vand.u32 %v23, 4294901760
    %v699 = vsub.f32 %v23, %v698
    %v700 = vand.u32 %v699, 4294901760
    %701 = vmatpush1.msra.mxu0 %v700
    %702 = vmatprep.subr.mxu0 0.0
    %v703 = vand.u32 %v24, 4294901760
    %v704 = vsub.f32 %v24, %v703
    %v705 = vand.u32 %v704, 4294901760
    %706 = vmatpush1.msra.mxu0 %v705
    %707 = vmatprep.subr.mxu0 0.0
    %v708 = vand.u32 %v25, 4294901760
    %v709 = vsub.f32 %v25, %v708
    %v710 = vand.u32 %v709, 4294901760
    %711 = vmatpush1.msra.mxu0 %v710
    %712 = vmatprep.subr.mxu0 0.0
    %v713 = vand.u32 %v26, 4294901760
    %v714 = vsub.f32 %v26, %v713
    %v715 = vand.u32 %v714, 4294901760
    %716 = vmatpush1.msra.mxu0 %v715
    %717 = vmatprep.subr.mxu0 0.0
    %v718 = vand.u32 %v27, 4294901760
    %v719 = vsub.f32 %v27, %v718
    %v720 = vand.u32 %v719, 4294901760
    %721 = vmatpush1.msra.mxu0 %v720
    %722 = vmatprep.subr.mxu0 0.0
    %v723 = vand.u32 %v28, 4294901760
    %v724 = vsub.f32 %v28, %v723
    %v725 = vand.u32 %v724, 4294901760
    %726 = vmatpush1.msra.mxu0 %v725
    %727 = vmatprep.subr.mxu0 0.0
    %v728 = vand.u32 %v29, 4294901760
    %v729 = vsub.f32 %v29, %v728
    %v730 = vand.u32 %v729, 4294901760
    %731 = vmatpush1.msra.mxu0 %v730
    %732 = vmatprep.subr.mxu0 0.0
    %v733 = vand.u32 %v30, 4294901760
    %v734 = vsub.f32 %v30, %v733
    %v735 = vand.u32 %v734, 4294901760
    %736 = vmatpush1.msra.mxu0 %v735
    %737 = vmatprep.subr.mxu0 0.0
    %v738 = vand.u32 %v31, 4294901760
    %v739 = vsub.f32 %v31, %v738
    %v740 = vand.u32 %v739, 4294901760
    %741 = vmatpush1.msra.mxu0 %v740
    %742 = vmatprep.subr.mxu0 0.0
    %v743 = vand.u32 %v32, 4294901760
    %v744 = vsub.f32 %v32, %v743
    %v745 = vand.u32 %v744, 4294901760
    %746 = vmatpush1.msra.mxu0 %v745
    %747 = vmatprep.subr.mxu0 0.0
    %v748 = vand.u32 %v33, 4294901760
    %v749 = vsub.f32 %v33, %v748
    %v750 = vand.u32 %v749, 4294901760
    %751 = vmatpush1.msra.mxu0 %v750
    %752 = vmatprep.subr.mxu0 0.0
    %v753 = vand.u32 %v34, 4294901760
    %v754 = vsub.f32 %v34, %v753
    %v755 = vand.u32 %v754, 4294901760
    %756 = vmatpush1.msra.mxu0 %v755
    %757 = vmatprep.subr.mxu0 0.0
    %v758 = vand.u32 %v35, 4294901760
    %v759 = vsub.f32 %v35, %v758
    %v760 = vand.u32 %v759, 4294901760
    %761 = vmatpush1.msra.mxu0 %v760
    %762 = vmatprep.subr.mxu0 0.0
    %v763 = vand.u32 %v36, 4294901760
    %v764 = vsub.f32 %v36, %v763
    %v765 = vand.u32 %v764, 4294901760
    %766 = vmatpush1.msra.mxu0 %v765
    %767 = vmatprep.subr.mxu0 0.0
    %v768 = vand.u32 %v37, 4294901760
    %v769 = vsub.f32 %v37, %v768
    %v770 = vand.u32 %v769, 4294901760
    %771 = vmatpush1.msra.mxu0 %v770
    %772 = vmatprep.subr.mxu0 0.0
    %v773 = vand.u32 %v38, 4294901760
    %v774 = vsub.f32 %v38, %v773
    %v775 = vand.u32 %v774, 4294901760
    %776 = vmatpush1.msra.mxu0 %v775
    %777 = vmatprep.subr.mxu0 0.0
    %v778 = vand.u32 %v39, 4294901760
    %v779 = vsub.f32 %v39, %v778
    %v780 = vand.u32 %v779, 4294901760
    %781 = vmatpush1.msra.mxu0 %v780
    %782 = vmatprep.subr.mxu0 0.0
    %v783 = vand.u32 %v40, 4294901760
    %v784 = vsub.f32 %v40, %v783
    %v785 = vand.u32 %v784, 4294901760
    %786 = vmatpush1.msra.mxu0 %v785
    %787 = vmatprep.subr.mxu0 0.0
    %v788 = vand.u32 %v41, 4294901760
    %v789 = vsub.f32 %v41, %v788
    %v790 = vand.u32 %v789, 4294901760
    %791 = vmatpush1.msra.mxu0 %v790
    %792 = vmatprep.subr.mxu0 0.0
    %v793 = vand.u32 %v42, 4294901760
    %v794 = vsub.f32 %v42, %v793
    %v795 = vand.u32 %v794, 4294901760
    %796 = vmatpush1.msra.mxu0 %v795
    %797 = vmatprep.subr.mxu0 0.0
    %v798 = vand.u32 %v43, 4294901760
    %v799 = vsub.f32 %v43, %v798
    %v800 = vand.u32 %v799, 4294901760
    %801 = vmatpush1.msra.mxu0 %v800
    %v802 = vand.u32 %v49, 4294901760
    %803 = vmatprep.mubr.f32.mxu0 %v802
    %v804 = vand.u32 %v48, 4294901760
    %805 = vmatmul.mubr.f32.gmra.mrb[0].mxu0 %v804
    %v806 = vpop.f32.mrb[0].mxu0
    %v807 = vadd.f32 %v639, %v806
    %v808 = vpop.f32.mrb[0].mxu0
    %809 = vdwg.mxu0
    %810 = vmatprep.subr.mxu0 0.0
    %v811 = vand.u32 %v12, 4294901760
    %812 = vmatpush1.msra.mxu0 %v811
    %813 = vmatprep.subr.mxu0 0.0
    %v814 = vand.u32 %v13, 4294901760
    %815 = vmatpush1.msra.mxu0 %v814
    %816 = vmatprep.subr.mxu0 0.0
    %v817 = vand.u32 %v14, 4294901760
    %818 = vmatpush1.msra.mxu0 %v817
    %819 = vmatprep.subr.mxu0 0.0
    %v820 = vand.u32 %v15, 4294901760
    %821 = vmatpush1.msra.mxu0 %v820
    %822 = vmatprep.subr.mxu0 0.0
    %v823 = vand.u32 %v16, 4294901760
    %824 = vmatpush1.msra.mxu0 %v823
    %825 = vmatprep.subr.mxu0 0.0
    %v826 = vand.u32 %v17, 4294901760
    %827 = vmatpush1.msra.mxu0 %v826
    %828 = vmatprep.subr.mxu0 0.0
    %v829 = vand.u32 %v18, 4294901760
    %830 = vmatpush1.msra.mxu0 %v829
    %831 = vmatprep.subr.mxu0 0.0
    %v832 = vand.u32 %v19, 4294901760
    %833 = vmatpush1.msra.mxu0 %v832
    %834 = vmatprep.subr.mxu0 0.0
    %v835 = vand.u32 %v20, 4294901760
    %836 = vmatpush1.msra.mxu0 %v835
    %837 = vmatprep.subr.mxu0 0.0
    %v838 = vand.u32 %v21, 4294901760
    %839 = vmatpush1.msra.mxu0 %v838
    %840 = vmatprep.subr.mxu0 0.0
    %v841 = vand.u32 %v22, 4294901760
    %842 = vmatpush1.msra.mxu0 %v841
    %843 = vmatprep.subr.mxu0 0.0
    %v844 = vand.u32 %v23, 4294901760
    %845 = vmatpush1.msra.mxu0 %v844
    %846 = vmatprep.subr.mxu0 0.0
    %v847 = vand.u32 %v24, 4294901760
    %848 = vmatpush1.msra.mxu0 %v847
    %849 = vmatprep.subr.mxu0 0.0
    %v850 = vand.u32 %v25, 4294901760
    %851 = vmatpush1.msra.mxu0 %v850
    %852 = vmatprep.subr.mxu0 0.0
    %v853 = vand.u32 %v26, 4294901760
    %854 = vmatpush1.msra.mxu0 %v853
    %855 = vmatprep.subr.mxu0 0.0
    %v856 = vand.u32 %v27, 4294901760
    %857 = vmatpush1.msra.mxu0 %v856
    %858 = vmatprep.subr.mxu0 0.0
    %v859 = vand.u32 %v28, 4294901760
    %860 = vmatpush1.msra.mxu0 %v859
    %861 = vmatprep.subr.mxu0 0.0
    %v862 = vand.u32 %v29, 4294901760
    %863 = vmatpush1.msra.mxu0 %v862
    %864 = vmatprep.subr.mxu0 0.0
    %v865 = vand.u32 %v30, 4294901760
    %866 = vmatpush1.msra.mxu0 %v865
    %867 = vmatprep.subr.mxu0 0.0
    %v868 = vand.u32 %v31, 4294901760
    %869 = vmatpush1.msra.mxu0 %v868
    %870 = vmatprep.subr.mxu0 0.0
    %v871 = vand.u32 %v32, 4294901760
    %872 = vmatpush1.msra.mxu0 %v871
    %873 = vmatprep.subr.mxu0 0.0
    %v874 = vand.u32 %v33, 4294901760
    %875 = vmatpush1.msra.mxu0 %v874
    %876 = vmatprep.subr.mxu0 0.0
    %v877 = vand.u32 %v34, 4294901760
    %878 = vmatpush1.msra.mxu0 %v877
    %879 = vmatprep.subr.mxu0 0.0
    %v880 = vand.u32 %v35, 4294901760
    %881 = vmatpush1.msra.mxu0 %v880
    %882 = vmatprep.subr.mxu0 0.0
    %v883 = vand.u32 %v36, 4294901760
    %884 = vmatpush1.msra.mxu0 %v883
    %885 = vmatprep.subr.mxu0 0.0
    %v886 = vand.u32 %v37, 4294901760
    %887 = vmatpush1.msra.mxu0 %v886
    %888 = vmatprep.subr.mxu0 0.0
    %v889 = vand.u32 %v38, 4294901760
    %890 = vmatpush1.msra.mxu0 %v889
    %891 = vmatprep.subr.mxu0 0.0
    %v892 = vand.u32 %v39, 4294901760
    %893 = vmatpush1.msra.mxu0 %v892
    %894 = vmatprep.subr.mxu0 0.0
    %v895 = vand.u32 %v40, 4294901760
    %896 = vmatpush1.msra.mxu0 %v895
    %897 = vmatprep.subr.mxu0 0.0
    %v898 = vand.u32 %v41, 4294901760
    %899 = vmatpush1.msra.mxu0 %v898
    %900 = vmatprep.subr.mxu0 0.0
    %v901 = vand.u32 %v42, 4294901760
    %902 = vmatpush1.msra.mxu0 %v901
    %903 = vmatprep.subr.mxu0 0.0
    %v904 = vand.u32 %v43, 4294901760
    %905 = vmatpush1.msra.mxu0 %v904
    %v906 = vand.u32 %v49, 4294901760
    %907 = vmatprep.mubr.f32.mxu0 %v906
    %v908 = vand.u32 %v48, 4294901760
    %909 = vmatmul.mubr.f32.gmra.mrb[0].mxu0 %v908
    %v910 = vpop.f32.mrb[0].mxu0
    %v911 = vadd.f32 %v807, %v910
    %v912 = vpop.f32.mrb[0].mxu0
    %913 = vdwg.mxu0
    %v915 = vcombine.high %v911, %v911
    %v916 = vrot.slane %v911, 6
    %v917 = vrot.slane %v915, 6
    %vm920 = vcmask 1041408
    %v921 = vsel %vm920, 0.0, %v916
    %v922 = vsel %vm920, 0.0, %v917
    %vm923 = vcmask 1045504
    %v924 = vsel %vm923, %v921, 0.0
    %v925 = vsel %vm923, %v922, 0.0
    %vm926 = vcmask 523264
    %927 = vst.msk [vmem:[#allocation2] sm:$0xff] %vm926, %v924
    %928 = vst.msk [vmem:[#allocation2 + $0x8] sm:$0xff] %vm926, %v925
    // Predicated region
    $region10: #{tpu_custom_call.1} parent=1 // pred_check
      _
    $region11: #{tpu_custom_call.1} parent=1 // pred_check_branch
      %930 = sbr.rel (0) target = $region13
    $region12: #{tpu_custom_call.1} parent=1 // pred_region
      %s932 = ssub.s32 256, 256
      %933 = vsyncadd [#allocation3], %s932
      %s934 = sshll.u32 [#allocation2], 4
      %s935 = int_to_ptr.vmem [resolvable:$true] %s934
      %940 = dma.vmem_to_hbm [thread:$0]  %s935, 256, %s2, [#allocation3], 128, 128, 8
    $region13: #{tpu_custom_call.1} parent=1 // pred_fallthru
      _
    // Predicated region
    $region14: #{tpu_custom_call.1} parent=1 // pred_check
      _
    $region15: #{tpu_custom_call.1} parent=1 // pred_check_branch
      %942 = sbr.rel (0) target = $region17
    $region16: #{tpu_custom_call.1} parent=1 // pred_region
      %943 = dma.done [#allocation3], 256
    $region17: #{tpu_custom_call.1} parent=1 // pred_fallthru
      _
    %944 = vsyncpa [#allocation3], 1

</llo_original>
